<compile_context>
chip_gen: v5e
topology: v5e:2x2
jax: 0.10.0
libtpu: 0.0.40
codegen_flags: <defaults>
</compile_context>

<pallas_src>
import math

import jax
import jax.numpy as jnp
import numpy as np
from jax.experimental import pallas as pl
from jax.experimental.pallas import tpu as pltpu

BN_EPS = 1e-5


# ---------------------------------------------------------------------------
# Kernel: temporal branch + lane-replicated FC2 (output lands lane-dense).
# ---------------------------------------------------------------------------
def _st_embedding_kernel(te_ref, w1_ref, p1_ref, w2r_ref, p2r_ref, out_ref):
    tm = te_ref.shape[0]
    K = w1_ref.shape[0]            # K = 7 + steps_per_day
    T = K - 7

    te = te_ref[...]                                   # (tm, 2) int32
    dow = jnp.mod(te[:, 0:1], 7)                       # in [0, 7)
    tod = jnp.mod(te[:, 1:2], T) + 7                   # in [7, 7+T)
    # dow / tod index ranges are disjoint, so the concat of the two one-hots
    # is a single fused compare.
    cols = jax.lax.broadcasted_iota(jnp.int32, (tm, K), 1)
    onehot = jnp.logical_or(cols == dow, cols == tod).astype(jnp.float32)

    # FC1 + BN affine + ReLU  (p rows = [conv_bias, bn_scale, bn_shift]).
    h = jnp.dot(onehot, w1_ref[...], preferred_element_type=jnp.float32)
    h = jnp.maximum((h + p1_ref[0:1, :]) * p1_ref[1:2, :] + p1_ref[2:3, :], 0.0)

    # FC2 with lane-replicated weights: (tm, D) @ (D, N*D) -> lane-dense tile
    # on the MXU.  p2r rows = [bias_rep, scale_rep, shift_rep + SE_flat].
    o = jnp.dot(h, w2r_ref[...], preferred_element_type=jnp.float32)
    out_ref[...] = (o + p2r_ref[0:1, :]) * p2r_ref[1:2, :] + p2r_ref[2:3, :]


# ---------------------------------------------------------------------------
# Tiling heuristics.
# ---------------------------------------------------------------------------
def _pick_block_m(M, row_bytes, target_tile_bytes=8 << 20):
    """~8 MiB output tiles, sublane-aligned, and >= 2 grid steps when possible."""
    if M <= 8:
        return M
    bm = max(8, int(target_tile_bytes // max(row_bytes, 1)) // 8 * 8)
    # Prefer >= 4 grid steps when the tiles stay >= 1 MiB, else >= 2 steps, so
    # both v7x TensorCores and the compute/writeback pipeline always engage.
    for parts in (4, 2):
        cap = (M + parts - 1) // parts
        cap = max(8, (cap + 7) // 8 * 8)
        if cap * row_bytes >= (1 << 20) or parts == 2:
            return min(bm, cap)
    return bm


def _vmem_limit_bytes(block_m, N, D, K):
    nd = N * D
    pad8 = lambda x: (x + 7) // 8 * 8
    est = 2 * block_m * nd * 4                    # output tile, double-buffered
    est += 2 * block_m * 128 * 4                  # TE tile (lane-padded), x2
    est += 2 * 4 * (pad8(K) * D + pad8(3) * D + pad8(D) * nd + pad8(3) * nd)
    est += 2 << 20                                # compiler scratch slack
    try:
        info = pltpu.get_tpu_info()
        phys = int(getattr(info, "vmem_capacity_bytes", 0) or 0)
    except Exception:
        phys = 0
    if phys <= 0:
        phys = 64 << 20                           # v7x (smallest VMEM) worst case
    cap = (phys * 3) // 4
    return int(min(max(est, 16 << 20), cap))


# ---------------------------------------------------------------------------
# Wrapper.
# ---------------------------------------------------------------------------
def spatio_temporal_embedding(SE, TE, T, params, *, block_m=None):
    """SE: (N, D) f32, TE: (B, L, 2) (dayofweek, timeofday), T: steps/day."""
    SE = jnp.asarray(SE, jnp.float32)
    N, D = SE.shape
    B, L, _ = TE.shape
    M = B * L
    ND = N * D
    K = 7 + T
    w_te1, p_te1 = params["te1"]
    w_te2, p_te2 = params["te2"]
    assert w_te1.shape == (K, D)

    # ---- SE branch: tiny (N, D) work, computed once in plain jnp and folded
    #      into the kernel's resident constants. ----
    def fc(x, w, p):
        return (x @ w + p[0]) * p[1] + p[2]

    se = jnp.maximum(fc(SE, *params["se1"]), 0.0)
    se = fc(se, *params["se2"])
    se_flat = se.reshape(1, ND)                   # row-major -> free reshape

    # ---- Lane-replicate the FC2 params so the FC2 matmul result lands
    #      lane-dense; fold the SE embedding into the replicated BN shift. ----
    w2_rep = jnp.tile(w_te2, (1, N))              # (D, N*D): [j, n*D+d] = w2[j, d]
    bias_rep = jnp.tile(p_te2[0:1, :], (1, N))
    scale_rep = jnp.tile(p_te2[1:2, :], (1, N))
    shift_rep = jnp.tile(p_te2[2:3, :], (1, N)) + se_flat
    p2_rep = jnp.concatenate([bias_rep, scale_rep, shift_rep], axis=0)  # (3, N*D)

    # TODO(synk): fractional time-of-day values would truncate here (the
    # PyTorch reference also assumes integral TE entries).
    te_int = TE.astype(jnp.int32).reshape(M, 2)

    row_bytes = ND * 4
    if block_m is None:
        block_m = _pick_block_m(M, row_bytes)
    block_m = int(min(max(block_m, 1), M))
    if block_m < M:
        block_m = max(8, (block_m // 8) * 8)      # sublane-aligned tiles
    grid_m = pl.cdiv(M, block_m)
    m_pad = grid_m * block_m
    if m_pad != M:
        # Pad only the tiny TE index array; the (M, N*D) output is NOT padded,
        # the final partial block is masked on writeback by Pallas.
        te_int = jnp.pad(te_int, ((0, m_pad - M), (0, 0)))

    cost = pl.CostEstimate(
        flops=int(2 * m_pad * K * D + 2 * m_pad * D * ND + 5 * m_pad * ND),
        transcendentals=0,
        bytes_accessed=int(M * ND * 4 + m_pad * 2 * 4
                           + (K * D + 3 * D + D * ND + 3 * ND) * 4),
    )

    out = pl.pallas_call(
        _st_embedding_kernel,
        out_shape=jax.ShapeDtypeStruct((M, ND), jnp.float32),
        grid_spec=pltpu.PrefetchScalarGridSpec(
            num_scalar_prefetch=0,
            grid=(grid_m,),
            in_specs=[
                pl.BlockSpec((block_m, 2), lambda i: (i, 0)),   # TE tile
                pl.BlockSpec((K, D), lambda i: (0, 0)),         # w_te1 (resident)
                pl.BlockSpec((3, D), lambda i: (0, 0)),         # p_te1 (resident)
                pl.BlockSpec((D, ND), lambda i: (0, 0)),        # w_te2 replicated
                pl.BlockSpec((3, ND), lambda i: (0, 0)),        # p_te2 repl + SE
            ],
            out_specs=pl.BlockSpec((block_m, ND), lambda i: (i, 0)),
        ),
        compiler_params=pltpu.CompilerParams(
            dimension_semantics=("parallel",),
            vmem_limit_bytes=_vmem_limit_bytes(block_m, N, D, K)),
        cost_estimate=cost,
    )(te_int, w_te1, p_te1, w2_rep, p2_rep)

    return out.reshape(B, L, N, D)


# ---------------------------------------------------------------------------
# Parameter construction + pure-JAX reference.
# ---------------------------------------------------------------------------
def make_fc_layer(key, in_dim, out_dim):
    """Xavier-uniform 1x1-conv weight, zero bias, default-init inference BN."""
    bound = math.sqrt(6.0 / (in_dim + out_dim))
    w = jax.random.uniform(key, (in_dim, out_dim), jnp.float32, -bound, bound)
    bias = jnp.zeros((out_dim,), jnp.float32)
    gamma = jnp.ones((out_dim,), jnp.float32)
    beta = jnp.zeros((out_dim,), jnp.float32)
    running_mean = jnp.zeros((out_dim,), jnp.float32)
    running_var = jnp.ones((out_dim,), jnp.float32)
    scale = gamma / jnp.sqrt(running_var + BN_EPS)
    shift = beta - running_mean * scale
    p = jnp.stack([bias, scale, shift], axis=0)   # (3, out_dim)
    return w, p


def reference_forward(SE, TE, T, params):
    """Pure-JAX reference (same math) for a sanity check."""
    def fc(x, w, p):
        return (x @ w + p[0]) * p[1] + p[2]

    se = jnp.maximum(fc(SE, *params["se1"]), 0.0)
    se = fc(se, *params["se2"])
    B, L, _ = TE.shape
    te_i = TE.astype(jnp.int32)
    dow = jax.nn.one_hot(te_i[..., 0] % 7, 7, dtype=jnp.float32)
    tod = jax.nn.one_hot(te_i[..., 1] % T, T, dtype=jnp.float32)
    te = jnp.concatenate([dow, tod], axis=-1).reshape(B * L, 7 + T)
    te = jnp.maximum(fc(te, *params["te1"]), 0.0)
    te = fc(te, *params["te2"])
    out = se[None, :, :] + te[:, None, :]
    return out.reshape(B, L, SE.shape[0], SE.shape[1])


if __name__ == "__main__":
    # Small, TPU-friendly sizes (N*D = 512 is lane-dense; grid of 2 M-tiles).
    D = 32            # embedding dim
    N = 16            # num_nodes
    B = 2             # batch
    NUM_HIS, NUM_PRED = 4, 4
    L = NUM_HIS + NUM_PRED
    T = 25            # steps_per_day  (so 7 + T = 32)

    key = jax.random.PRNGKey(0)
    k_se, k_te, k1, k2, k3, k4 = jax.random.split(key, 6)

    SE = jax.random.normal(k_se, (N, D), jnp.float32)
    TE = jnp.stack(
        [jax.random.randint(k_te, (B, L), 0, 7),
         jax.random.randint(jax.random.fold_in(k_te, 1), (B, L), 0, T)],
        axis=-1).astype(jnp.float32)                       # (B, L, 2)

    params = {
        "se1": make_fc_layer(k1, D, D),
        "se2": make_fc_layer(k2, D, D),
        "te1": make_fc_layer(k3, 7 + T, D),
        "te2": make_fc_layer(k4, D, D),
    }

    out = spatio_temporal_embedding(SE, TE, T, params)
    out = jax.block_until_ready(out)

    ref = reference_forward(SE, TE, T, params)
    np.testing.assert_allclose(np.asarray(out), np.asarray(ref),
                               rtol=1e-5, atol=1e-5)
    assert out.shape == (B, L, N, D)
    print("KERNEL_OK")
</pallas_src>

<mosaic_0001>
module attributes {stable_mosaic.version = 11 : i64} {
  func.func @_st_embedding_kernel(%arg0: i32, %arg1: memref<8x2xi32, #tpu.memory_space<vmem>>, %arg2: memref<32x32xf32, #tpu.memory_space<vmem>>, %arg3: memref<3x32xf32, #tpu.memory_space<vmem>>, %arg4: memref<32x512xf32, #tpu.memory_space<vmem>>, %arg5: memref<3x512xf32, #tpu.memory_space<vmem>>, %arg6: memref<8x512xf32, #tpu.memory_space<vmem>>) attributes {dimension_semantics = [#tpu.dimension_semantics<parallel>], iteration_bounds = array<i64: 2>, scalar_prefetch = 0 : i64, scratch_operands = 0 : i64, tpu.core_type = #tpu.core_type<tc>, window_params = [{transform_indices = @transform_0, window_bounds = array<i64: 8, 2>}, {pipeline_mode = #tpu.pipeline_mode<synchronous>, transform_indices = @transform_1, window_bounds = array<i64: 32, 32>}, {pipeline_mode = #tpu.pipeline_mode<synchronous>, transform_indices = @transform_2, window_bounds = array<i64: 3, 32>}, {pipeline_mode = #tpu.pipeline_mode<synchronous>, transform_indices = @transform_3, window_bounds = array<i64: 32, 512>}, {pipeline_mode = #tpu.pipeline_mode<synchronous>, transform_indices = @transform_4, window_bounds = array<i64: 3, 512>}, {transform_indices = @transform_5, window_bounds = array<i64: 8, 512>}]} {
    %c0 = arith.constant 0 : index
    %c0_0 = arith.constant 0 : index
    %0 = vector.load %arg1[%c0, %c0_0] : memref<8x2xi32, #tpu.memory_space<vmem>>, vector<8x2xi32>
    %1 = vector.extract_strided_slice %0 {offsets = [0, 0], sizes = [8, 1], strides = [1, 1]} : vector<8x2xi32> to vector<8x1xi32>
    %c7_i32 = arith.constant 7 : i32
    %c0_i32 = arith.constant 0 : i32
    %2 = arith.cmpi eq, %c7_i32, %c0_i32 : i32
    %c1_i32 = arith.constant 1 : i32
    %3 = arith.select %2, %c1_i32, %c7_i32 : i32
    %4 = vector.broadcast %3 : i32 to vector<8x1xi32>
    %5 = arith.remsi %1, %4 : vector<8x1xi32>
    %c0_i32_1 = arith.constant 0 : i32
    %6 = vector.broadcast %c0_i32_1 : i32 to vector<8x1xi32>
    %7 = arith.cmpi ne, %5, %6 : vector<8x1xi32>
    %c0_i32_2 = arith.constant 0 : i32
    %8 = vector.broadcast %c0_i32_2 : i32 to vector<8x1xi32>
    %9 = arith.cmpi slt, %5, %8 : vector<8x1xi32>
    %c0_i32_3 = arith.constant 0 : i32
    %10 = arith.cmpi slt, %3, %c0_i32_3 : i32
    %11 = vector.broadcast %10 : i1 to vector<8x1xi1>
    %12 = vector.broadcast %11 : vector<8x1xi1> to vector<8x1xi1>
    %13 = arith.xori %9, %12 : vector<8x1xi1>
    %14 = arith.andi %13, %7 : vector<8x1xi1>
    %15 = vector.broadcast %3 : i32 to vector<8x1xi32>
    %16 = arith.addi %5, %15 : vector<8x1xi32>
    %17 = arith.select %14, %16, %5 : vector<8x1xi1>, vector<8x1xi32>
    %18 = vector.extract_strided_slice %0 {offsets = [0, 1], sizes = [8, 1], strides = [1, 1]} : vector<8x2xi32> to vector<8x1xi32>
    %c25_i32 = arith.constant 25 : i32
    %c0_i32_4 = arith.constant 0 : i32
    %19 = arith.cmpi eq, %c25_i32, %c0_i32_4 : i32
    %c1_i32_5 = arith.constant 1 : i32
    %20 = arith.select %19, %c1_i32_5, %c25_i32 : i32
    %21 = vector.broadcast %20 : i32 to vector<8x1xi32>
    %22 = arith.remsi %18, %21 : vector<8x1xi32>
    %c0_i32_6 = arith.constant 0 : i32
    %23 = vector.broadcast %c0_i32_6 : i32 to vector<8x1xi32>
    %24 = arith.cmpi ne, %22, %23 : vector<8x1xi32>
    %c0_i32_7 = arith.constant 0 : i32
    %25 = vector.broadcast %c0_i32_7 : i32 to vector<8x1xi32>
    %26 = arith.cmpi slt, %22, %25 : vector<8x1xi32>
    %c0_i32_8 = arith.constant 0 : i32
    %27 = arith.cmpi slt, %20, %c0_i32_8 : i32
    %28 = vector.broadcast %27 : i1 to vector<8x1xi1>
    %29 = vector.broadcast %28 : vector<8x1xi1> to vector<8x1xi1>
    %30 = arith.xori %26, %29 : vector<8x1xi1>
    %31 = arith.andi %30, %24 : vector<8x1xi1>
    %32 = vector.broadcast %20 : i32 to vector<8x1xi32>
    %33 = arith.addi %22, %32 : vector<8x1xi32>
    %34 = arith.select %31, %33, %22 : vector<8x1xi1>, vector<8x1xi32>
    %c7_i32_9 = arith.constant 7 : i32
    %35 = vector.broadcast %c7_i32_9 : i32 to vector<8x1xi32>
    %36 = arith.addi %34, %35 : vector<8x1xi32>
    %37 = tpu.iota {dimensions = array<i32: 1>} : vector<8x32xi32>
    %38 = vector.broadcast %17 : vector<8x1xi32> to vector<8x32xi32>
    %39 = arith.cmpi eq, %37, %38 : vector<8x32xi32>
    %40 = vector.broadcast %36 : vector<8x1xi32> to vector<8x32xi32>
    %41 = arith.cmpi eq, %37, %40 : vector<8x32xi32>
    %42 = arith.ori %39, %41 : vector<8x32xi1>
    %43 = arith.extui %42 : vector<8x32xi1> to vector<8x32xi32>
    %44 = arith.sitofp %43 : vector<8x32xi32> to vector<8x32xf32>
    %c0_10 = arith.constant 0 : index
    %c0_11 = arith.constant 0 : index
    %45 = vector.load %arg2[%c0_10, %c0_11] : memref<32x32xf32, #tpu.memory_space<vmem>>, vector<32x32xf32>
    %cst = arith.constant dense<0.000000e+00> : vector<8x32xf32>
    %46 = tpu.matmul %44, %45, %cst {dimension_numbers = #tpu.dot_dimension_numbers<[1], [0], [0], [1], [0, 0, 1, 1], [], []>} : vector<8x32xf32>, vector<32x32xf32>, vector<8x32xf32> -> vector<8x32xf32>
    %c0_12 = arith.constant 0 : index
    %c0_13 = arith.constant 0 : index
    %47 = vector.load %arg3[%c0_12, %c0_13] : memref<3x32xf32, #tpu.memory_space<vmem>>, vector<1x32xf32>
    %48 = vector.broadcast %47 : vector<1x32xf32> to vector<8x32xf32>
    %49 = arith.addf %46, %48 : vector<8x32xf32>
    %c1 = arith.constant 1 : index
    %c0_14 = arith.constant 0 : index
    %50 = vector.load %arg3[%c1, %c0_14] : memref<3x32xf32, #tpu.memory_space<vmem>>, vector<1x32xf32>
    %51 = vector.broadcast %50 : vector<1x32xf32> to vector<8x32xf32>
    %52 = arith.mulf %49, %51 : vector<8x32xf32>
    %c2 = arith.constant 2 : index
    %c0_15 = arith.constant 0 : index
    %53 = vector.load %arg3[%c2, %c0_15] : memref<3x32xf32, #tpu.memory_space<vmem>>, vector<1x32xf32>
    %54 = vector.broadcast %53 : vector<1x32xf32> to vector<8x32xf32>
    %55 = arith.addf %52, %54 : vector<8x32xf32>
    %cst_16 = arith.constant 0.000000e+00 : f32
    %56 = vector.broadcast %cst_16 : f32 to vector<8x32xf32>
    %57 = arith.maximumf %55, %56 : vector<8x32xf32>
    %c0_17 = arith.constant 0 : index
    %c0_18 = arith.constant 0 : index
    %58 = vector.load %arg4[%c0_17, %c0_18] : memref<32x512xf32, #tpu.memory_space<vmem>>, vector<32x512xf32>
    %cst_19 = arith.constant dense<0.000000e+00> : vector<8x512xf32>
    %59 = tpu.matmul %57, %58, %cst_19 {dimension_numbers = #tpu.dot_dimension_numbers<[1], [0], [0], [1], [0, 0, 1, 1], [], []>} : vector<8x32xf32>, vector<32x512xf32>, vector<8x512xf32> -> vector<8x512xf32>
    %c0_20 = arith.constant 0 : index
    %c0_21 = arith.constant 0 : index
    %60 = vector.load %arg5[%c0_20, %c0_21] : memref<3x512xf32, #tpu.memory_space<vmem>>, vector<1x512xf32>
    %61 = vector.broadcast %60 : vector<1x512xf32> to vector<8x512xf32>
    %62 = arith.addf %59, %61 : vector<8x512xf32>
    %c1_22 = arith.constant 1 : index
    %c0_23 = arith.constant 0 : index
    %63 = vector.load %arg5[%c1_22, %c0_23] : memref<3x512xf32, #tpu.memory_space<vmem>>, vector<1x512xf32>
    %64 = vector.broadcast %63 : vector<1x512xf32> to vector<8x512xf32>
    %65 = arith.mulf %62, %64 : vector<8x512xf32>
    %c2_24 = arith.constant 2 : index
    %c0_25 = arith.constant 0 : index
    %66 = vector.load %arg5[%c2_24, %c0_25] : memref<3x512xf32, #tpu.memory_space<vmem>>, vector<1x512xf32>
    %67 = vector.broadcast %66 : vector<1x512xf32> to vector<8x512xf32>
    %68 = arith.addf %65, %67 : vector<8x512xf32>
    %c0_26 = arith.constant 0 : index
    %c0_27 = arith.constant 0 : index
    %69 = vector.load %arg6[%c0_26, %c0_27] : memref<8x512xf32, #tpu.memory_space<vmem>>, vector<8x512xf32>
    tpu.vector_store %arg6[%c0_26, %c0_27], %68 {strides = array<i32>} : memref<8x512xf32, #tpu.memory_space<vmem>>, vector<8x512xf32>,
    return
  }
  func.func @transform_0(%arg0: i32) -> (i32, i32) {
    %c0_i32 = arith.constant 0 : i32
    %c0_i32_0 = arith.constant 0 : i32
    return %arg0, %c0_i32 : i32, i32
  }
  func.func @transform_1(%arg0: i32) -> (i32, i32) {
    %c0_i32 = arith.constant 0 : i32
    %c0_i32_0 = arith.constant 0 : i32
    %c0_i32_1 = arith.constant 0 : i32
    return %c0_i32, %c0_i32_0 : i32, i32
  }
  func.func @transform_2(%arg0: i32) -> (i32, i32) {
    %c0_i32 = arith.constant 0 : i32
    %c0_i32_0 = arith.constant 0 : i32
    %c0_i32_1 = arith.constant 0 : i32
    return %c0_i32, %c0_i32_0 : i32, i32
  }
  func.func @transform_3(%arg0: i32) -> (i32, i32) {
    %c0_i32 = arith.constant 0 : i32
    %c0_i32_0 = arith.constant 0 : i32
    %c0_i32_1 = arith.constant 0 : i32
    return %c0_i32, %c0_i32_0 : i32, i32
  }
  func.func @transform_4(%arg0: i32) -> (i32, i32) {
    %c0_i32 = arith.constant 0 : i32
    %c0_i32_0 = arith.constant 0 : i32
    %c0_i32_1 = arith.constant 0 : i32
    return %c0_i32, %c0_i32_0 : i32, i32
  }
  func.func @transform_5(%arg0: i32) -> (i32, i32) {
    %c0_i32 = arith.constant 0 : i32
    %c0_i32_0 = arith.constant 0 : i32
    return %arg0, %c0_i32 : i32, i32
  }
}

</mosaic_0001>

<llo_original>
// kernel: tpu_custom_call.1
$region0: #{tpu_custom_call.1}
  #allocation0 [shape = 'u32[]', space=smem, size = 0x4, offset = 0x4, fixed_abs, tag = 'smem constant byte address 0x4 - core index']
  #allocation1 [shape = 'u32[72,128]{1,0:T(1,128)}', space=vmem, size = 0x9000, scoped, tag = 'internal scratch']
  %s0 = inlined_call_operand.vmem [shape: s32[16,2], index: 0, kind: input, shape index: {}]
  %s1 = inlined_call_operand.hbm [shape: f32[32,32], index: 1, kind: input, shape index: {}]
  %s2 = inlined_call_operand.vmem [shape: f32[3,32], index: 2, kind: input, shape index: {}]
  %s3 = inlined_call_operand.hbm [shape: f32[32,512], index: 3, kind: input, shape index: {}]
  %s4 = inlined_call_operand.vmem [shape: f32[3,512], index: 4, kind: input, shape index: {}]
  %s5 = inlined_call_operand.hbm [shape: f32[16,512], index: 5, kind: output, shape index: {}]
  %s6 = sld [smem:[#allocation0]]
  $region61: #{tpu_custom_call.1} parent=0
    _
  %s8 = ssub.s32 1, %s6
  %s9 = scalar_select 0, %s8, %s6
  $region1: #{tpu_custom_call.1} parent=0
    #allocation2 [shape = 'u8[16384]{0}', space=vmem, size = 0x4000, scoped, tag = 'input window, operand 1, single buffered']
    #allocation3 [shape = 's32[2]{0}', space=sflag, size = 0x8, scoped, tag = 'scoped memory for tpu_custom_call.1']
    #allocation4 [shape = 's32[2]{0}', space=sflag, size = 0x8, scoped, tag = 'scoped memory for tpu_custom_call.1']
    #allocation5 [shape = 'u8[65536]{0}', space=vmem, size = 0x10000, scoped, tag = 'input window, operand 3, single buffered']
    #allocation6 [shape = 's32[1]{0}', space=sflag, size = 0x4, scoped, tag = 'scoped memory for tpu_custom_call.1']
    #allocation7 [shape = 'u8[32768]{0}', space=vmem, size = 0x8000, scoped, tag = 'output window, operand 0']
    %10 = vsyncpa [#allocation3], 0
    %11 = vsyncpa [#allocation6], 0
    %12 = vsyncpa [#allocation4], 0
    %s13 = scalar_lea.sflag [#allocation4], 1
    %14 = vsyncpa %s13, 0
    loop: start=0, step=1, limit=4
    $region2: #{tpu_custom_call.1} parent=1 // loop_pre_header
      _
    $region3: #{tpu_custom_call.1} parent=1 // loop_header
      %s16 = sphi 0, %s20
      %p17 = scmp.ge.s32.totalorder %s16, 4
      %s26 = sphi 0, %s28
      %s29 = sphi 0, %s26
      %s30 = sphi 0, %s29
      %s46 = sphi 0, %s30
      %s50 = sphi 0, %s50
      %s52 = sphi 0, %s50
      %s53 = sphi 0, %s52
      %s67 = sphi 0, %s53
      %s71 = sphi 0, %s71
      %s73 = sphi 0, %s71
      %s74 = sphi 0, %s73
      %s88 = sphi 0, %s74
      %s92 = sphi 0, %s92
      %s94 = sphi 0, %s92
      %s95 = sphi 0, %s94
      %s109 = sphi 0, %s95
      %s113 = sphi 0, %s113
      %s115 = sphi 0, %s113
      %s116 = sphi 0, %s115
      %s130 = sphi 0, %s116
      %s136 = sphi 0, %s138
      %s139 = sphi 0, %s136
      %s140 = sphi 0, %s139
      %s156 = sphi 0, %s140
    $region4: #{tpu_custom_call.1} parent=1 // loop_header_branch
      %19 = sbr.rel (%p17) target = $region8
    $region5: #{tpu_custom_call.1} parent=1 // loop_body
      %s21 = ssub.s32 %s16, 1
      %s22 = ssub.s32 %s16, 2
      %s23 = sadd.s32 %s16, 1
      %s24 = ssub.s32 %s16, %s23
      %p25 = scmp.eq.s32.totalorder %s24, 0
      %s27 = sadd.s32 %s26, 1
      %s28 = scalar_select %p25, %s26, %s27
      %p31 = pneg %p25
      %p32 = scmp.eq.s32.totalorder %s16, 1
      %p33 = por %p31, %p32
      %p34 = scmp.ne.s32.totalorder %s26, %s29
      %p35 = scmp.eq.s32.totalorder %s16, 0
      %p36 = por %p34, %p35
      %p37 = scmp.ne.s32.totalorder %s26, %s29
      %p38 = scmp.eq.s32.totalorder %s21, 1
      %p39 = por %p37, %p38
      %p40 = scmp.ne.s32.totalorder %s29, %s30
      %p41 = scmp.eq.s32.totalorder %s21, 0
      %p42 = por %p40, %p41
      %p43 = scmp.ne.s32.totalorder %s29, %s30
      %p44 = scmp.eq.s32.totalorder %s22, 1
      %p45 = por %p43, %p44
      %p47 = scmp.ne.s32.totalorder %s30, %s46
      %p48 = scmp.eq.s32.totalorder %s22, 0
      %p49 = por %p47, %p48
      %s51 = sadd.s32 %s50, 1
      %p54 = scmp.eq.s32.totalorder %s16, 1
      %p55 = scmp.ne.s32.totalorder %s50, %s52
      %p56 = scmp.eq.s32.totalorder %s16, 0
      %p57 = por %p55, %p56
      %p58 = scmp.ne.s32.totalorder %s50, %s52
      %p59 = scmp.eq.s32.totalorder %s21, 1
      %p60 = por %p58, %p59
      %p61 = scmp.ne.s32.totalorder %s52, %s53
      %p62 = scmp.eq.s32.totalorder %s21, 0
      %p63 = por %p61, %p62
      %p64 = scmp.ne.s32.totalorder %s52, %s53
      %p65 = scmp.eq.s32.totalorder %s22, 1
      %p66 = por %p64, %p65
      %p68 = scmp.ne.s32.totalorder %s53, %s67
      %p69 = scmp.eq.s32.totalorder %s22, 0
      %p70 = por %p68, %p69
      %s72 = sadd.s32 %s71, 1
      %p75 = scmp.eq.s32.totalorder %s16, 1
      %p76 = scmp.ne.s32.totalorder %s71, %s73
      %p77 = scmp.eq.s32.totalorder %s16, 0
      %p78 = por %p76, %p77
      %p79 = scmp.ne.s32.totalorder %s71, %s73
      %p80 = scmp.eq.s32.totalorder %s21, 1
      %p81 = por %p79, %p80
      %p82 = scmp.ne.s32.totalorder %s73, %s74
      %p83 = scmp.eq.s32.totalorder %s21, 0
      %p84 = por %p82, %p83
      %p85 = scmp.ne.s32.totalorder %s73, %s74
      %p86 = scmp.eq.s32.totalorder %s22, 1
      %p87 = por %p85, %p86
      %p89 = scmp.ne.s32.totalorder %s74, %s88
      %p90 = scmp.eq.s32.totalorder %s22, 0
      %p91 = por %p89, %p90
      %s93 = sadd.s32 %s92, 1
      %p96 = scmp.eq.s32.totalorder %s16, 1
      %p97 = scmp.ne.s32.totalorder %s92, %s94
      %p98 = scmp.eq.s32.totalorder %s16, 0
      %p99 = por %p97, %p98
      %p100 = scmp.ne.s32.totalorder %s92, %s94
      %p101 = scmp.eq.s32.totalorder %s21, 1
      %p102 = por %p100, %p101
      %p103 = scmp.ne.s32.totalorder %s94, %s95
      %p104 = scmp.eq.s32.totalorder %s21, 0
      %p105 = por %p103, %p104
      %p106 = scmp.ne.s32.totalorder %s94, %s95
      %p107 = scmp.eq.s32.totalorder %s22, 1
      %p108 = por %p106, %p107
      %p110 = scmp.ne.s32.totalorder %s95, %s109
      %p111 = scmp.eq.s32.totalorder %s22, 0
      %p112 = por %p110, %p111
      %s114 = sadd.s32 %s113, 1
      %p117 = scmp.eq.s32.totalorder %s16, 1
      %p118 = scmp.ne.s32.totalorder %s113, %s115
      %p119 = scmp.eq.s32.totalorder %s16, 0
      %p120 = por %p118, %p119
      %p121 = scmp.ne.s32.totalorder %s113, %s115
      %p122 = scmp.eq.s32.totalorder %s21, 1
      %p123 = por %p121, %p122
      %p124 = scmp.ne.s32.totalorder %s115, %s116
      %p125 = scmp.eq.s32.totalorder %s21, 0
      %p126 = por %p124, %p125
      %p127 = scmp.ne.s32.totalorder %s115, %s116
      %p128 = scmp.eq.s32.totalorder %s22, 1
      %p129 = por %p127, %p128
      %p131 = scmp.ne.s32.totalorder %s116, %s130
      %p132 = scmp.eq.s32.totalorder %s22, 0
      %p133 = por %p131, %p132
      %s134 = ssub.s32 %s16, %s23
      %p135 = scmp.eq.s32.totalorder %s134, 0
      %s137 = sadd.s32 %s136, 1
      %s138 = scalar_select %p135, %s136, %s137
      %p141 = pneg %p135
      %p142 = scmp.eq.s32.totalorder %s16, 1
      %p143 = por %p141, %p142
      %p144 = scmp.ne.s32.totalorder %s136, %s139
      %p145 = scmp.eq.s32.totalorder %s16, 0
      %p146 = por %p144, %p145
      %p147 = scmp.ne.s32.totalorder %s136, %s139
      %p148 = scmp.eq.s32.totalorder %s21, 1
      %p149 = por %p147, %p148
      %p150 = scmp.ne.s32.totalorder %s139, %s140
      %p151 = scmp.eq.s32.totalorder %s21, 0
      %p152 = por %p150, %p151
      %p153 = scmp.ne.s32.totalorder %s139, %s140
      %p154 = scmp.eq.s32.totalorder %s22, 1
      %p155 = por %p153, %p154
      %p157 = scmp.ne.s32.totalorder %s140, %s156
      %p158 = scmp.eq.s32.totalorder %s22, 0
      %p159 = por %p157, %p158
      %p160 = scmp.le.s32.totalorder 1, %s16
      %p161 = scmp.lt.s32.totalorder %s16, 3
      %p162 = pnand %p160, %p161
      %p163 = pneg %p162
      // Predicated region
      $region9: #{tpu_custom_call.1} parent=5 // pred_check
        _
      $region10: #{tpu_custom_call.1} parent=5 // pred_check_branch
        %165 = sbr.rel (%p162) target = $region12
      $region11: #{tpu_custom_call.1} parent=5 // pred_region
        %s166 = ssub.s32 %s16, 1
        // Predicated region
        $region13: #{tpu_custom_call.1} parent=11 // pred_check
          %p167 = pneg %p63
        $region14: #{tpu_custom_call.1} parent=11 // pred_check_branch
          %169 = sbr.rel (%p167) target = $region16
        $region15: #{tpu_custom_call.1} parent=11 // pred_region
          %171 = vsyncadd [#allocation3], 0
          %s172 = sshll.u32 %s1, 4
          %s173 = int_to_ptr.hbm [resolvable:$true] %s172
          %s174 = sshll.u32 [#allocation2], 4
          %s175 = int_to_ptr.vmem [resolvable:$true] %s174
          %180 = dma.hbm_to_vmem [thread:$0]  %s173, 512, %s175, [#allocation3], 128, 128, 8
        $region16: #{tpu_custom_call.1} parent=11 // pred_fallthru
          _
        // Predicated region
        $region17: #{tpu_custom_call.1} parent=11 // pred_check
          %p181 = pneg %p84
        $region18: #{tpu_custom_call.1} parent=11 // pred_check_branch
          %183 = sbr.rel (%p181) target = $region20
        $region19: #{tpu_custom_call.1} parent=11 // pred_region
          _
        $region20: #{tpu_custom_call.1} parent=11 // pred_fallthru
          _
        // Predicated region
        $region21: #{tpu_custom_call.1} parent=11 // pred_check
          %p184 = pneg %p105
        $region22: #{tpu_custom_call.1} parent=11 // pred_check_branch
          %186 = sbr.rel (%p184) target = $region24
        $region23: #{tpu_custom_call.1} parent=11 // pred_region
          %188 = vsyncadd [#allocation6], 0
          %s189 = sshll.u32 %s3, 4
          %s190 = int_to_ptr.hbm [resolvable:$true] %s189
          %s191 = sshll.u32 [#allocation5], 4
          %s192 = int_to_ptr.vmem [resolvable:$true] %s191
          %197 = dma.hbm_to_vmem [thread:$0]  %s190, 2048, %s192, [#allocation6], 512, 512, 32
        $region24: #{tpu_custom_call.1} parent=11 // pred_fallthru
          _
        // Predicated region
        $region25: #{tpu_custom_call.1} parent=11 // pred_check
          %p198 = pneg %p126
        $region26: #{tpu_custom_call.1} parent=11 // pred_check_branch
          %200 = sbr.rel (%p198) target = $region28
        $region27: #{tpu_custom_call.1} parent=11 // pred_region
          _
        $region28: #{tpu_custom_call.1} parent=11 // pred_fallthru
          _
      $region12: #{tpu_custom_call.1} parent=5 // pred_fallthru
        _
      %p201 = scmp.lt.s32.totalorder %s16, 2
      // Predicated region
      $region29: #{tpu_custom_call.1} parent=5 // pred_check
        %p202 = pneg %p201
      $region30: #{tpu_custom_call.1} parent=5 // pred_check_branch
        %204 = sbr.rel (%p202) target = $region32
      $region31: #{tpu_custom_call.1} parent=5 // pred_region
        // Predicated region
        $region33: #{tpu_custom_call.1} parent=31 // pred_check
          %p205 = pneg %p36
        $region34: #{tpu_custom_call.1} parent=31 // pred_check_branch
          %207 = sbr.rel (%p205) target = $region36
        $region35: #{tpu_custom_call.1} parent=31 // pred_region
          %p208 = scmp.lt.s32.totalorder %s16, 1
          %s209 = scalar_select %p208, %s16, 1
          %s210 = smul.addr %s209, 8
          %s211 = scalar_lea.vmem %s0, %s210
        $region36: #{tpu_custom_call.1} parent=31 // pred_fallthru
          _
      $region32: #{tpu_custom_call.1} parent=5 // pred_fallthru
        _
      %p212 = scmp.le.s32.totalorder 1, %s16
      %p213 = scmp.lt.s32.totalorder %s16, 3
      %p214 = pnand %p212, %p213
      %p215 = pneg %p214
      // Predicated region
      $region37: #{tpu_custom_call.1} parent=5 // pred_check
        _
      $region38: #{tpu_custom_call.1} parent=5 // pred_check_branch
        %217 = sbr.rel (%p214) target = $region40
      $region39: #{tpu_custom_call.1} parent=5 // pred_region
        %s218 = ssub.s32 %s16, 1
        // Predicated region
        $region41: #{tpu_custom_call.1} parent=39 // pred_check
          %p219 = pneg %p63
        $region42: #{tpu_custom_call.1} parent=39 // pred_check_branch
          %221 = sbr.rel (%p219) target = $region44
        $region43: #{tpu_custom_call.1} parent=39 // pred_region
          %223 = dma.done [#allocation3], 512
        $region44: #{tpu_custom_call.1} parent=39 // pred_fallthru
          _
        // Predicated region
        $region45: #{tpu_custom_call.1} parent=39 // pred_check
          %p224 = pneg %p105
        $region46: #{tpu_custom_call.1} parent=39 // pred_check_branch
          %226 = sbr.rel (%p224) target = $region48
        $region47: #{tpu_custom_call.1} parent=39 // pred_region
          %228 = dma.done [#allocation6], 2048
        $region48: #{tpu_custom_call.1} parent=39 // pred_fallthru
          _
        %p229 = scmp.lt.s32.totalorder %s21, 1
        %s230 = scalar_select %p229, %s21, 1
        %s231 = smul.addr %s230, 8
        %s232 = scalar_lea.vmem %s0, %s231
        %p233 = pneg %p42
        %p234 = pneg %p39
        %p235 = pneg %p63
        %p236 = pneg %p60
        %p237 = pneg %p84
        %p238 = pneg %p81
        %p239 = pneg %p105
        %p240 = pneg %p102
        %p241 = pneg %p126
        %p242 = pneg %p123
        %p243 = pneg %p152
        %p244 = pneg %p149
        %s245 = sand.u32 %s139, 1
        %s246 = scalar_lea.sflag [#allocation4], %s245
        %s247 = sand.u32 %s139, 1
        %s248 = smul.addr %s247, 32
        %s249 = scalar_lea.vmem [#allocation7], %s248
        %p250 = scmp.lt.s32.totalorder %s21, 1
        %s251 = scalar_select %p250, %s21, 1
        %s252 = smul.addr %s251, 8
        %s253 = scalar_lea.vmem %s0, %s252
        %v254 = vld [vmem:[%s253] sm:$0xff]
        %vm255 = vcmp.lt.s32.totalorder %v254, 0
        %v256 = vsub.s32 0, %v254
        %v257 = vsel %vm255, %v256, %v254
        %v258 = vand.u32 %v257, 65535
        %v259 = vshrl.u32 %v257, 16
        %v261 = vmul.u32 %v258, 9362
        %v262 = vmul.u32 %v258, 37449
        %v263 = vmul.u32 %v259, 9362
        %v264 = vmul.u32 %v259, 37449
        %v265 = vshll.u32 %v262, 16
        %v266 = vshrl.u32 %v262, 16
        %v267 = vshll.u32 %v263, 16
        %v268 = vshrl.u32 %v263, 16
        %vm269 = vc.u32 %v261, %v265
        %v270 = vsel %vm269, 1, 0
        %v271 = vadd.s32 %v261, %v265
        %v272 = vadd.s32 %v264, %v270
        %vm273 = vc.u32 %v271, %v267
        %v274 = vsel %vm273, 1, 0
        %v275 = vadd.s32 %v271, %v267
        %v276 = vadd.s32 %v272, %v274
        %v277 = vadd.s32 %v276, %v266
        %v278 = vadd.s32 %v277, %v268
        %vm279 = vc.u32 %v275, 2454267026
        %v280 = vsel %vm279, 1, 0
        %v281 = vadd.s32 %v278, %v280
        %v282 = vshrl.u32 %v281, 2
        %v283 = vmul.u32 %v282, 7
        %v284 = vsub.s32 %v257, %v283
        %v285 = vsub.s32 0, %v284
        %v286 = vsel %vm255, %v285, %v284
        %vm287 = vcmp.ne.s32.totalorder %v286, 0
        %vm288 = vcmp.lt.s32.totalorder %v286, 0
        %vm289 = vmand %vm288, %vm287
        %v290 = vadd.s32 %v286, 7
        %v291 = vsel %vm289, %v290, %v286
        %vm292 = vcmp.lt.s32.totalorder %v254, 0
        %v293 = vsub.s32 0, %v254
        %v294 = vsel %vm292, %v293, %v254
        %v295 = vand.u32 %v294, 65535
        %v296 = vshrl.u32 %v294, 16
        %v298 = vmul.u32 %v295, 2622
        %v299 = vmul.u32 %v295, 41943
        %v300 = vmul.u32 %v296, 2622
        %v301 = vmul.u32 %v296, 41943
        %v302 = vshll.u32 %v299, 16
        %v303 = vshrl.u32 %v299, 16
        %v304 = vshll.u32 %v300, 16
        %v305 = vshrl.u32 %v300, 16
        %vm306 = vc.u32 %v298, %v302
        %v307 = vsel %vm306, 1, 0
        %v308 = vadd.s32 %v298, %v302
        %v309 = vadd.s32 %v301, %v307
        %vm310 = vc.u32 %v308, %v304
        %v311 = vsel %vm310, 1, 0
        %v312 = vadd.s32 %v308, %v304
        %v313 = vadd.s32 %v309, %v311
        %v314 = vadd.s32 %v313, %v303
        %v315 = vadd.s32 %v314, %v305
        %v316 = vshrl.u32 %v315, 4
        %v317 = vmul.u32 %v316, 25
        %v318 = vsub.s32 %v294, %v317
        %v319 = vsub.s32 0, %v318
        %v320 = vsel %vm292, %v319, %v318
        %vm321 = vcmp.ne.s32.totalorder %v320, 0
        %vm322 = vcmp.lt.s32.totalorder %v320, 0
        %vm323 = vmand %vm322, %vm321
        %v324 = vadd.s32 %v320, 25
        %v325 = vsel %vm323, %v324, %v320
        %v326 = vadd.s32 %v325, 7
        %v327 = vlaneseq
        %v328 = vand.u32 %v327, 127
        %329 = vset.pattern.permute.xlu0 0
        %330 = vperm.xlu0 %329, %v291
        %v331 = vpop.permute.xlu0 %330
        %vm332 = vcmp.eq.s32.totalorder %v328, %v331
        %333 = vset.pattern.permute.xlu0 1
        %334 = vperm.xlu0 %333, %v326
        %v335 = vpop.permute.xlu0 %334
        %vm336 = vcmp.eq.s32.totalorder %v328, %v335
        %vm337 = vmor %vm332, %vm336
        %v338 = vsel %vm337, 1, 0
        %v339 = vcvt.s32.f32 %v338
        %v340 = vld [vmem:[#allocation2] sm:$0xff]
        %v341 = vld [vmem:[#allocation2 + $0x8] sm:$0xff]
        %v342 = vld [vmem:[#allocation2 + $0x10] sm:$0xff]
        %v343 = vld [vmem:[#allocation2 + $0x18] sm:$0xff]
        %v344 = vld [vmem:[%s2] sm:$0x1]
        %v345 = vperm.slane %v344, 0
        %vm346 = vcmask 261120
        %v348 = vsel %vm346, %v339, 0
        %350 = vmatpush.msra.mxu0 0.0
        %351 = vmatpush.msra.mxu0 0.0
        %352 = vmatpush.msra.mxu0 0.0
        %353 = vmatpush.msra.mxu0 0.0
        %354 = vmatpush.msra.mxu0 0.0
        %355 = vmatpush.msra.mxu0 0.0
        %356 = vmatpush.msra.mxu0 0.0
        %357 = vmatpush.msra.mxu0 0.0
        %358 = vmatpush.msra.mxu0 0.0
        %359 = vmatpush.msra.mxu0 0.0
        %360 = vmatpush.msra.mxu0 0.0
        %361 = vmatpush.msra.mxu0 0.0
        %362 = vmatpush.msra.mxu0 %v343
        %363 = vmatpush.msra.mxu0 %v342
        %364 = vmatpush.msra.mxu0 %v341
        %365 = vmatpush.msra.mxu0 %v340
        %366 = vmatmul.f32.gmra.mxu0 %v348
        %v367 = vpop.f32.mrf.mxu0
        %v368 = vadd.f32 %v345, %v367
        %369 = vdwg.mxu0
        %v370 = vld [vmem:[%s2 + $0x1] sm:$0x1]
        %v371 = vperm.slane %v370, 0
        %v372 = vmul.f32 %v368, %v371
        %v373 = vld [vmem:[%s2 + $0x2] sm:$0x1]
        %v374 = vperm.slane %v373, 0
        %v375 = vadd.f32 %v372, %v374
        %v376 = vmax.f32 %v375, 0.0
        %v377 = vld [vmem:[#allocation5] sm:$0xff]
        %v378 = vld [vmem:[#allocation5 + $0x8] sm:$0xff]
        %v379 = vld [vmem:[#allocation5 + $0x10] sm:$0xff]
        %v380 = vld [vmem:[#allocation5 + $0x18] sm:$0xff]
        %v381 = vld [vmem:[#allocation5 + $0x20] sm:$0xff]
        %v382 = vld [vmem:[#allocation5 + $0x28] sm:$0xff]
        %v383 = vld [vmem:[#allocation5 + $0x30] sm:$0xff]
        %v384 = vld [vmem:[#allocation5 + $0x38] sm:$0xff]
        %v385 = vld [vmem:[#allocation5 + $0x40] sm:$0xff]
        %v386 = vld [vmem:[#allocation5 + $0x48] sm:$0xff]
        %v387 = vld [vmem:[#allocation5 + $0x50] sm:$0xff]
        %v388 = vld [vmem:[#allocation5 + $0x58] sm:$0xff]
        %v389 = vld [vmem:[#allocation5 + $0x60] sm:$0xff]
        %v390 = vld [vmem:[#allocation5 + $0x68] sm:$0xff]
        %v391 = vld [vmem:[#allocation5 + $0x70] sm:$0xff]
        %v392 = vld [vmem:[#allocation5 + $0x78] sm:$0xff]
        %v393 = vld [vmem:[%s4] ss:$4 sm:$0xf]
        %v395 = vperm.slane %v393, 0
        %v396 = vperm.slane %v393, 1
        %v397 = vperm.slane %v393, 2
        %v398 = vperm.slane %v393, 3
        %v404 = vsel %vm346, %v376, 0
        %406 = vmatpush.msra.mxu0 0.0
        %407 = vmatpush.msra.mxu0 0.0
        %408 = vmatpush.msra.mxu0 0.0
        %409 = vmatpush.msra.mxu0 0.0
        %410 = vmatpush.msra.mxu0 0.0
        %411 = vmatpush.msra.mxu0 0.0
        %412 = vmatpush.msra.mxu0 0.0
        %413 = vmatpush.msra.mxu0 0.0
        %414 = vmatpush.msra.mxu0 0.0
        %415 = vmatpush.msra.mxu0 0.0
        %416 = vmatpush.msra.mxu0 0.0
        %417 = vmatpush.msra.mxu0 0.0
        %418 = vmatpush.msra.mxu0 %v389
        %419 = vmatpush.msra.mxu0 %v385
        %420 = vmatpush.msra.mxu0 %v381
        %421 = vmatpush.msra.mxu0 %v377
        %422 = vmatmul.f32.gmra.mxu0 %v404
        %v423 = vpop.f32.mrf.mxu0
        %v424 = vadd.f32 %v395, %v423
        %425 = vdwg.mxu0
        %426 = vmatpush.msra.mxu0 0.0
        %427 = vmatpush.msra.mxu0 0.0
        %428 = vmatpush.msra.mxu0 0.0
        %429 = vmatpush.msra.mxu0 0.0
        %430 = vmatpush.msra.mxu0 0.0
        %431 = vmatpush.msra.mxu0 0.0
        %432 = vmatpush.msra.mxu0 0.0
        %433 = vmatpush.msra.mxu0 0.0
        %434 = vmatpush.msra.mxu0 0.0
        %435 = vmatpush.msra.mxu0 0.0
        %436 = vmatpush.msra.mxu0 0.0
        %437 = vmatpush.msra.mxu0 0.0
        %438 = vmatpush.msra.mxu0 %v390
        %439 = vmatpush.msra.mxu0 %v386
        %440 = vmatpush.msra.mxu0 %v382
        %441 = vmatpush.msra.mxu0 %v378
        %442 = vmatmul.f32.gmra.mxu0 %v404
        %v443 = vpop.f32.mrf.mxu0
        %v444 = vadd.f32 %v396, %v443
        %445 = vdwg.mxu0
        %446 = vmatpush.msra.mxu0 0.0
        %447 = vmatpush.msra.mxu0 0.0
        %448 = vmatpush.msra.mxu0 0.0
        %449 = vmatpush.msra.mxu0 0.0
        %450 = vmatpush.msra.mxu0 0.0
        %451 = vmatpush.msra.mxu0 0.0
        %452 = vmatpush.msra.mxu0 0.0
        %453 = vmatpush.msra.mxu0 0.0
        %454 = vmatpush.msra.mxu0 0.0
        %455 = vmatpush.msra.mxu0 0.0
        %456 = vmatpush.msra.mxu0 0.0
        %457 = vmatpush.msra.mxu0 0.0
        %458 = vmatpush.msra.mxu0 %v391
        %459 = vmatpush.msra.mxu0 %v387
        %460 = vmatpush.msra.mxu0 %v383
        %461 = vmatpush.msra.mxu0 %v379
        %462 = vmatmul.f32.gmra.mxu0 %v404
        %v463 = vpop.f32.mrf.mxu0
        %v464 = vadd.f32 %v397, %v463
        %465 = vdwg.mxu0
        %466 = vmatpush.msra.mxu0 0.0
        %467 = vmatpush.msra.mxu0 0.0
        %468 = vmatpush.msra.mxu0 0.0
        %469 = vmatpush.msra.mxu0 0.0
        %470 = vmatpush.msra.mxu0 0.0
        %471 = vmatpush.msra.mxu0 0.0
        %472 = vmatpush.msra.mxu0 0.0
        %473 = vmatpush.msra.mxu0 0.0
        %474 = vmatpush.msra.mxu0 0.0
        %475 = vmatpush.msra.mxu0 0.0
        %476 = vmatpush.msra.mxu0 0.0
        %477 = vmatpush.msra.mxu0 0.0
        %478 = vmatpush.msra.mxu0 %v392
        %479 = vmatpush.msra.mxu0 %v388
        %480 = vmatpush.msra.mxu0 %v384
        %481 = vmatpush.msra.mxu0 %v380
        %482 = vmatmul.f32.gmra.mxu0 %v404
        %v483 = vpop.f32.mrf.mxu0
        %v484 = vadd.f32 %v398, %v483
        %485 = vdwg.mxu0
        %s486 = scalar_lea.vmem %s4, 1
        %v487 = vld [vmem:[%s486] ss:$4 sm:$0xf]
        %v489 = vperm.slane %v487, 0
        %v490 = vperm.slane %v487, 1
        %v491 = vperm.slane %v487, 2
        %v492 = vperm.slane %v487, 3
        %v497 = vmul.f32 %v424, %v489
        %v498 = vmul.f32 %v444, %v490
        %v499 = vmul.f32 %v464, %v491
        %v500 = vmul.f32 %v484, %v492
        %s501 = scalar_lea.vmem %s4, 2
        %v502 = vld [vmem:[%s501] ss:$4 sm:$0xf]
        %v504 = vperm.slane %v502, 0
        %v505 = vperm.slane %v502, 1
        %v506 = vperm.slane %v502, 2
        %v507 = vperm.slane %v502, 3
        %v512 = vadd.f32 %v497, %v504
        %v513 = vadd.f32 %v498, %v505
        %v514 = vadd.f32 %v499, %v506
        %v515 = vadd.f32 %v500, %v507
        %516 = vst [vmem:[%s249] sm:$0xff] %v512
        %517 = vst [vmem:[%s249 + $0x8] sm:$0xff] %v513
        %518 = vst [vmem:[%s249 + $0x10] sm:$0xff] %v514
        %519 = vst [vmem:[%s249 + $0x18] sm:$0xff] %v515
        %s520 = sand.u32 %s139, 1
        %s521 = scalar_lea.sflag [#allocation4], %s520
        %s522 = sand.u32 %s139, 1
        %s523 = smul.addr %s522, 32
        %s524 = scalar_lea.vmem [#allocation7], %s523
        // Predicated region
        $region49: #{tpu_custom_call.1} parent=39 // pred_check
          %p525 = pneg %p149
        $region50: #{tpu_custom_call.1} parent=39 // pred_check_branch
          %527 = sbr.rel (%p525) target = $region52
        $region51: #{tpu_custom_call.1} parent=39 // pred_region
          %529 = vsyncadd %s521, 0
          %s530 = smul.addr %s21, 4
          %s531 = smul.addr %s530, 8
          %s532 = scalar_lea.hbm %s5, %s531
          %s534 = sshll.u32 %s524, 4
          %s535 = int_to_ptr.vmem [resolvable:$true] %s534
          %s536 = sshll.u32 %s532, 4
          %s537 = int_to_ptr.hbm [resolvable:$true] %s536
          %539 = dma.vmem_to_hbm [thread:$0]  %s535, 512, %s537, %s521
        $region52: #{tpu_custom_call.1} parent=39 // pred_fallthru
          _
      $region40: #{tpu_custom_call.1} parent=5 // pred_fallthru
        _
      %p540 = scmp.le.s32.totalorder 2, %s16
      // Predicated region
      $region53: #{tpu_custom_call.1} parent=5 // pred_check
        %p541 = pneg %p540
      $region54: #{tpu_custom_call.1} parent=5 // pred_check_branch
        %543 = sbr.rel (%p541) target = $region56
      $region55: #{tpu_custom_call.1} parent=5 // pred_region
        %s544 = ssub.s32 %s16, 2
        // Predicated region
        $region57: #{tpu_custom_call.1} parent=55 // pred_check
          %p545 = pneg %p155
        $region58: #{tpu_custom_call.1} parent=55 // pred_check_branch
          %547 = sbr.rel (%p545) target = $region60
        $region59: #{tpu_custom_call.1} parent=55 // pred_region
          %s548 = sand.u32 %s140, 1
          %s549 = scalar_lea.sflag [#allocation4], %s548
          %s550 = sand.u32 %s140, 1
          %s551 = smul.addr %s550, 32
          %s552 = scalar_lea.vmem [#allocation7], %s551
          %554 = dma.done %s549, 512
        $region60: #{tpu_custom_call.1} parent=55 // pred_fallthru
          _
      $region56: #{tpu_custom_call.1} parent=5 // pred_fallthru
        _
    $region6: #{tpu_custom_call.1} parent=1 // loop_footer
      %s20 = sadd.s32 1, %s16
    $region7: #{tpu_custom_call.1} parent=1 // loop_footer_branch
      %15 = sbr.rel target = $region3
    $region8: #{tpu_custom_call.1} parent=1 // loop_exit
      _
    %555 = vsyncpa [#allocation3], 1
    %s556 = scalar_lea.sflag [#allocation3], 1
    %557 = vsyncpa %s556, 1
    %558 = vsyncpa [#allocation6], 1
    %559 = vsyncpa [#allocation4], 1
    %s560 = scalar_lea.sflag [#allocation4], 1
    %561 = vsyncpa %s560, 1

</llo_original>
